<compile_context>
chip_gen: v6e
topology: v6e:2x2x1
jax: 0.10.0
libtpu: 0.0.40
codegen_flags: <defaults>
</compile_context>

<pallas_src>
import functools

import jax
import jax.numpy as jnp
from jax import lax
from jax.experimental import pallas as pl
from jax.experimental.pallas import tpu as pltpu


# --------------------------------------------------------------------------
# Tiling / VMEM budgeting helpers (generation-aware)
# --------------------------------------------------------------------------

def _round_up(x, mult):
    return ((x + mult - 1) // mult) * mult


def _vmem_tile_budget():
    """Target bytes for ONE tile. The pipelined footprint is ~4 tiles
    (input + output, each double-buffered), so keep a single tile small
    enough that 4x stays well under the scoped VMEM default on every chip
    (v5e: 16 MiB default / 128 MiB phys; v6e: 32/128; v7x: 32/64)."""
    try:
        cap = pltpu.get_tpu_info().vmem_capacity_bytes
    except Exception:
        cap = 64 << 20  # assume the smallest (v7x) if the query is unavailable
    return int(max(512 << 10, min(2 << 20, cap // 32)))


def _vmem_limit_bytes(tile_bytes, param_bytes):
    """Explicit scoped-VMEM limit: in+out double-buffered tiles + params + slack."""
    need = 4 * tile_bytes + 2 * param_bytes + (1 << 20)
    return int(min(32 << 20, max(16 << 20, need)))


def _pick_row_tile(m, row_bytes, target_tile_bytes, min_steps=8):
    """channels_last: rows per tile. ~target bytes per tile AND >= ~min_steps
    grid steps (when m allows), so the pipeline actually overlaps DMA."""
    tm = max(8, (target_tile_bytes // max(1, row_bytes)) // 8 * 8)
    tm = min(tm, _round_up(m, 8))
    step_cap = max(8, (m // min_steps) // 8 * 8)
    return min(tm, step_cap)


def _pick_lane_tile(hw_pad, batch, c, itemsize, target_tile_bytes, min_steps=8):
    """channels_first: lanes per tile (multiple of 128 dividing hw_pad), sized by
    bytes and shrunk until batch * (hw_pad // tn) gives enough grid steps."""
    k = hw_pad // 128                      # hw_pad is always a multiple of 128
    col_bytes = max(1, c * itemsize)
    desired = max(1, target_tile_bytes // (col_bytes * 128))

    def best_div(limit):
        best = 1
        for d in range(1, k + 1):
            if k % d == 0 and d <= limit:
                best = d
        return best

    d = best_div(desired)
    while batch * (k // d) < min_steps and d > 1:
        d = best_div(d - 1)
    return d * 128


# --------------------------------------------------------------------------
# channels_last: normalize over the last dim (== F.layer_norm)
# --------------------------------------------------------------------------

def _ln_channels_last_kernel(x_ref, w_ref, b_ref, o_ref, *, eps, n_valid):
    x = x_ref[...].astype(jnp.float32)                      # (tm, Cp), lanes = C
    inv_n = 1.0 / n_valid
    # Two independent lane reductions (can overlap on the XLU); zero-padded
    # lanes contribute nothing because we divide by the true C.
    s1 = jnp.sum(x, axis=-1, keepdims=True)
    s2 = jnp.sum(x * x, axis=-1, keepdims=True)
    mu = s1 * inv_n
    var = jnp.maximum(s2 * inv_n - mu * mu, 0.0)
    inv = lax.rsqrt(var + eps)                              # EUP rsqrt
    w = w_ref[...].astype(jnp.float32)
    b = b_ref[...].astype(jnp.float32)
    o_ref[...] = ((x - mu) * inv * w + b).astype(o_ref.dtype)


def layer_norm_channels_last(x, weight, bias, eps=1e-6):
    """LayerNorm over the last dim of x (any leading shape), per-feature affine."""
    orig_shape = x.shape
    c = orig_shape[-1]
    m = 1
    for s in orig_shape[:-1]:
        m *= s
    x2 = x.reshape(m, c)
    w2 = weight.reshape(1, c)
    b2 = bias.reshape(1, c)

    # Keep stores lane-dense: pad C up to a multiple of 128 with zeros.
    c_pad = _round_up(c, 128)
    if c_pad != c:
        x2 = jnp.pad(x2, ((0, 0), (0, c_pad - c)))
        w2 = jnp.pad(w2, ((0, 0), (0, c_pad - c)))
        b2 = jnp.pad(b2, ((0, 0), (0, c_pad - c)))

    itemsize = x.dtype.itemsize
    row_bytes = c_pad * itemsize
    tm = _pick_row_tile(m, row_bytes, _vmem_tile_budget())
    tile_bytes = tm * row_bytes
    param_bytes = 2 * c_pad * weight.dtype.itemsize

    out = pl.pallas_call(
        functools.partial(_ln_channels_last_kernel, eps=float(eps), n_valid=float(c)),
        out_shape=jax.ShapeDtypeStruct((m, c_pad), x.dtype),
        grid=(pl.cdiv(m, tm),),
        in_specs=[
            pl.BlockSpec((tm, c_pad), lambda i: (i, 0)),
            pl.BlockSpec((1, c_pad), lambda i: (0, 0)),
            pl.BlockSpec((1, c_pad), lambda i: (0, 0)),
        ],
        out_specs=pl.BlockSpec((tm, c_pad), lambda i: (i, 0)),
        compiler_params=pltpu.CompilerParams(
            dimension_semantics=("parallel",),
            vmem_limit_bytes=_vmem_limit_bytes(tile_bytes, param_bytes)),
    )(x2, w2, b2)

    if c_pad != c:
        out = out[:, :c]
    return out.reshape(orig_shape)


# --------------------------------------------------------------------------
# channels_first: normalize over dim 1 of (B, C, H, W[, ...])
# --------------------------------------------------------------------------

def _ln_channels_first_kernel(x_ref, w_ref, b_ref, o_ref, *, eps):
    x = x_ref[...].astype(jnp.float32)                      # (C, tn), lanes = spatial
    inv_c = 1.0 / x.shape[0]
    s1 = jnp.sum(x, axis=0, keepdims=True)                  # independent sublane reduces
    s2 = jnp.sum(x * x, axis=0, keepdims=True)
    mu = s1 * inv_c
    var = jnp.maximum(s2 * inv_c - mu * mu, 0.0)
    inv = lax.rsqrt(var + eps)
    w = w_ref[...].astype(jnp.float32)
    b = b_ref[...].astype(jnp.float32)
    o_ref[...] = ((x - mu) * inv * w + b).astype(o_ref.dtype)


def layer_norm_channels_first(x, weight, bias, eps=1e-6):
    """Channels-first LayerNorm: normalize over dim 1, per-channel affine."""
    bsz, c = x.shape[0], x.shape[1]
    hw = 1
    for s in x.shape[2:]:
        hw *= s
    x3 = x.reshape(bsz, c, hw)        # lanes = flattened spatial -> lane-dense

    # Spatial columns are independent, so zero-padding the lane dim is harmless
    # (padded columns are sliced off) and keeps tiles a multiple of 128 lanes.
    hw_pad = _round_up(hw, 128)
    if hw_pad != hw:
        x3 = jnp.pad(x3, ((0, 0), (0, 0), (0, hw_pad - hw)))

    w2 = weight.reshape(c, 1)
    b2 = bias.reshape(c, 1)

    itemsize = x.dtype.itemsize
    tn = _pick_lane_tile(hw_pad, bsz, c, itemsize, _vmem_tile_budget())
    tile_bytes = c * tn * itemsize
    param_bytes = 2 * c * weight.dtype.itemsize

    out = pl.pallas_call(
        functools.partial(_ln_channels_first_kernel, eps=float(eps)),
        out_shape=jax.ShapeDtypeStruct((bsz, c, hw_pad), x.dtype),
        grid=(bsz, hw_pad // tn),
        in_specs=[
            pl.BlockSpec((None, c, tn), lambda bb, j: (bb, 0, j)),
            pl.BlockSpec((c, 1), lambda bb, j: (0, 0)),
            pl.BlockSpec((c, 1), lambda bb, j: (0, 0)),
        ],
        out_specs=pl.BlockSpec((None, c, tn), lambda bb, j: (bb, 0, j)),
        compiler_params=pltpu.CompilerParams(
            dimension_semantics=("parallel", "parallel"),
            vmem_limit_bytes=_vmem_limit_bytes(tile_bytes, param_bytes)),
    )(x3, w2, b2)

    if hw_pad != hw:
        out = out[:, :, :hw]
    return out.reshape(x.shape)


# --------------------------------------------------------------------------
# Main
# --------------------------------------------------------------------------

def _ref_channels_last(x, w, b, eps):
    mu = jnp.mean(x, axis=-1, keepdims=True)
    var = jnp.mean((x - mu) ** 2, axis=-1, keepdims=True)
    return (x - mu) / jnp.sqrt(var + eps) * w + b


def _ref_channels_first(x, w, b, eps):
    u = jnp.mean(x, axis=1, keepdims=True)
    s = jnp.mean((x - u) ** 2, axis=1, keepdims=True)
    shape = (1, -1) + (1,) * (x.ndim - 2)
    return (x - u) / jnp.sqrt(s + eps) * w.reshape(shape) + b.reshape(shape)


if __name__ == "__main__":
    key = jax.random.PRNGKey(0)
    kx1, kx2, kx3, kx4, kw, kb, kw2, kb2 = jax.random.split(key, 8)
    eps = 1e-6

    # ---- channels_last, lane-aligned C ----
    B, C, H, W = 2, 128, 16, 16
    weight = 1.0 + 0.1 * jax.random.normal(kw, (C,), jnp.float32)
    bias = 0.1 * jax.random.normal(kb, (C,), jnp.float32)
    x_cl = jax.random.normal(kx1, (B, H, W, C), jnp.float32)
    ln_cl = jax.jit(functools.partial(layer_norm_channels_last, eps=eps))
    y_cl = jax.block_until_ready(ln_cl(x_cl, weight, bias))
    ref = _ref_channels_last(x_cl, weight, bias, eps)
    assert y_cl.shape == x_cl.shape
    assert bool(jnp.all(jnp.isfinite(y_cl)))
    assert bool(jnp.allclose(y_cl, ref, atol=1e-5, rtol=1e-5)), float(
        jnp.max(jnp.abs(y_cl - ref)))

    # ---- channels_first, lane-aligned spatial ----
    x_cf = jax.random.normal(kx2, (B, C, H, W), jnp.float32)
    ln_cf = jax.jit(functools.partial(layer_norm_channels_first, eps=eps))
    y_cf = jax.block_until_ready(ln_cf(x_cf, weight, bias))
    ref = _ref_channels_first(x_cf, weight, bias, eps)
    assert y_cf.shape == x_cf.shape
    assert bool(jnp.all(jnp.isfinite(y_cf)))
    assert bool(jnp.allclose(y_cf, ref, atol=1e-5, rtol=1e-5)), float(
        jnp.max(jnp.abs(y_cf - ref)))

    # ---- channels_last, C not a multiple of 128 (padding path) ----
    C2 = 96
    w96 = 1.0 + 0.1 * jax.random.normal(kw2, (C2,), jnp.float32)
    b96 = 0.1 * jax.random.normal(kb2, (C2,), jnp.float32)
    x_cl2 = jax.random.normal(kx3, (2, 8, 8, C2), jnp.float32)
    y_cl2 = jax.block_until_ready(ln_cl(x_cl2, w96, b96))
    ref = _ref_channels_last(x_cl2, w96, b96, eps)
    assert bool(jnp.allclose(y_cl2, ref, atol=1e-5, rtol=1e-5)), float(
        jnp.max(jnp.abs(y_cl2 - ref)))

    # ---- channels_first, spatial not a multiple of 128 (padding path) ----
    C3 = 32
    w32 = 1.0 + 0.1 * jax.random.normal(kw2, (C3,), jnp.float32)
    b32 = 0.1 * jax.random.normal(kb2, (C3,), jnp.float32)
    x_cf2 = jax.random.normal(kx4, (2, C3, 15, 15), jnp.float32)
    y_cf2 = jax.block_until_ready(ln_cf(x_cf2, w32, b32))
    ref = _ref_channels_first(x_cf2, w32, b32, eps)
    assert bool(jnp.allclose(y_cf2, ref, atol=1e-5, rtol=1e-5)), float(
        jnp.max(jnp.abs(y_cf2 - ref)))

    print("KERNEL_OK")
</pallas_src>

<mosaic_0001>
module attributes {stable_mosaic.version = 11 : i64} {
  func.func @_ln_channels_last_kernel(%arg0: i32, %arg1: memref<64x128xf32, #tpu.memory_space<vmem>>, %arg2: memref<1x128xf32, #tpu.memory_space<vmem>>, %arg3: memref<1x128xf32, #tpu.memory_space<vmem>>, %arg4: memref<64x128xf32, #tpu.memory_space<vmem>>) attributes {dimension_semantics = [#tpu.dimension_semantics<parallel>], iteration_bounds = array<i64: 8>, scalar_prefetch = 0 : i64, scratch_operands = 0 : i64, tpu.core_type = #tpu.core_type<tc>, window_params = [{transform_indices = @transform_0, window_bounds = array<i64: 64, 128>}, {pipeline_mode = #tpu.pipeline_mode<synchronous>, transform_indices = @transform_1, window_bounds = array<i64: 1, 128>}, {pipeline_mode = #tpu.pipeline_mode<synchronous>, transform_indices = @transform_2, window_bounds = array<i64: 1, 128>}, {transform_indices = @transform_3, window_bounds = array<i64: 64, 128>}]} {
    %c0 = arith.constant 0 : index
    %c0_0 = arith.constant 0 : index
    %0 = vector.load %arg1[%c0, %c0_0] : memref<64x128xf32, #tpu.memory_space<vmem>>, vector<64x128xf32>
    %cst = arith.constant dense<0.000000e+00> : vector<64xf32>
    %1 = vector.multi_reduction <add>, %0, %cst [1] : vector<64x128xf32> to vector<64xf32>
    %2 = vector.shape_cast %1 : vector<64xf32> to vector<64x1xf32>
    %3 = arith.mulf %0, %0 : vector<64x128xf32>
    %cst_1 = arith.constant dense<0.000000e+00> : vector<64xf32>
    %4 = vector.multi_reduction <add>, %3, %cst_1 [1] : vector<64x128xf32> to vector<64xf32>
    %5 = vector.shape_cast %4 : vector<64xf32> to vector<64x1xf32>
    %cst_2 = arith.constant 7.812500e-03 : f32
    %6 = vector.broadcast %cst_2 : f32 to vector<64x1xf32>
    %7 = arith.mulf %2, %6 : vector<64x1xf32>
    %cst_3 = arith.constant 7.812500e-03 : f32
    %8 = vector.broadcast %cst_3 : f32 to vector<64x1xf32>
    %9 = arith.mulf %5, %8 : vector<64x1xf32>
    %10 = arith.mulf %7, %7 : vector<64x1xf32>
    %11 = arith.subf %9, %10 : vector<64x1xf32>
    %cst_4 = arith.constant 0.000000e+00 : f32
    %12 = vector.broadcast %cst_4 : f32 to vector<64x1xf32>
    %13 = arith.maximumf %11, %12 : vector<64x1xf32>
    %cst_5 = arith.constant 9.99999997E-7 : f32
    %14 = vector.broadcast %cst_5 : f32 to vector<64x1xf32>
    %15 = arith.addf %13, %14 : vector<64x1xf32>
    %16 = math.rsqrt %15 : vector<64x1xf32>
    %c0_6 = arith.constant 0 : index
    %c0_7 = arith.constant 0 : index
    %17 = vector.load %arg2[%c0_6, %c0_7] : memref<1x128xf32, #tpu.memory_space<vmem>>, vector<1x128xf32>
    %c0_8 = arith.constant 0 : index
    %c0_9 = arith.constant 0 : index
    %18 = vector.load %arg3[%c0_8, %c0_9] : memref<1x128xf32, #tpu.memory_space<vmem>>, vector<1x128xf32>
    %19 = vector.broadcast %7 : vector<64x1xf32> to vector<64x128xf32>
    %20 = arith.subf %0, %19 : vector<64x128xf32>
    %21 = vector.broadcast %16 : vector<64x1xf32> to vector<64x128xf32>
    %22 = arith.mulf %20, %21 : vector<64x128xf32>
    %23 = vector.broadcast %17 : vector<1x128xf32> to vector<64x128xf32>
    %24 = arith.mulf %22, %23 : vector<64x128xf32>
    %25 = vector.broadcast %18 : vector<1x128xf32> to vector<64x128xf32>
    %26 = arith.addf %24, %25 : vector<64x128xf32>
    %c0_10 = arith.constant 0 : index
    %c0_11 = arith.constant 0 : index
    %27 = vector.load %arg4[%c0_10, %c0_11] : memref<64x128xf32, #tpu.memory_space<vmem>>, vector<64x128xf32>
    tpu.vector_store %arg4[%c0_10, %c0_11], %26 {strides = array<i32>} : memref<64x128xf32, #tpu.memory_space<vmem>>, vector<64x128xf32>,
    return
  }
  func.func @transform_0(%arg0: i32) -> (i32, i32) {
    %c0_i32 = arith.constant 0 : i32
    %c0_i32_0 = arith.constant 0 : i32
    return %arg0, %c0_i32 : i32, i32
  }
  func.func @transform_1(%arg0: i32) -> (i32, i32) {
    %c0_i32 = arith.constant 0 : i32
    %c0_i32_0 = arith.constant 0 : i32
    %c0_i32_1 = arith.constant 0 : i32
    return %c0_i32, %c0_i32_0 : i32, i32
  }
  func.func @transform_2(%arg0: i32) -> (i32, i32) {
    %c0_i32 = arith.constant 0 : i32
    %c0_i32_0 = arith.constant 0 : i32
    %c0_i32_1 = arith.constant 0 : i32
    return %c0_i32, %c0_i32_0 : i32, i32
  }
  func.func @transform_3(%arg0: i32) -> (i32, i32) {
    %c0_i32 = arith.constant 0 : i32
    %c0_i32_0 = arith.constant 0 : i32
    return %arg0, %c0_i32 : i32, i32
  }
}

</mosaic_0001>

<llo_original>
// kernel: layer_norm_channels_last.1
$region0: #{layer_norm_channels_last.1}
  #allocation0 [shape = 'u32[]', space=smem, size = 0x4, offset = 0x4, fixed_abs, tag = 'smem constant byte address 0x4 - core index']
  #allocation1 [shape = 'u32[144,128]{1,0:T(1,128)}', space=vmem, size = 0x12000, scoped, tag = 'internal scratch']
  %s0 = inlined_call_operand.hbm [shape: f32[512,128], index: 0, kind: input, shape index: {}]
  %s1 = inlined_call_operand.vmem [shape: f32[1,128], index: 1, kind: input, shape index: {}]
  %s2 = inlined_call_operand.vmem [shape: f32[1,128], index: 2, kind: input, shape index: {}]
  %s3 = inlined_call_operand.hbm [shape: f32[512,128], index: 3, kind: output, shape index: {}]
  %s4 = sld [smem:[#allocation0]]
  $region49: #{layer_norm_channels_last.1} parent=0
    _
  %s6 = ssub.s32 1, %s4
  %s7 = scalar_select 0, %s6, %s4
  $region1: #{layer_norm_channels_last.1} parent=0
    #allocation2 [shape = 'u8[65536]{0}', space=vmem, size = 0x10000, scoped, tag = 'input window, operand 0']
    #allocation3 [shape = 's32[2]{0}', space=sflag, size = 0x8, scoped, tag = 'scoped memory for layer_norm_channels_last.1']
    #allocation4 [shape = 's32[2]{0}', space=sflag, size = 0x8, scoped, tag = 'scoped memory for layer_norm_channels_last.1']
    #allocation5 [shape = 'u8[65536]{0}', space=vmem, size = 0x10000, scoped, tag = 'output window, operand 0']
    %8 = vsyncpa [#allocation3], 0
    %s9 = scalar_lea.sflag [#allocation3], 1
    %10 = vsyncpa %s9, 0
    %11 = vsyncpa [#allocation4], 0
    %s12 = scalar_lea.sflag [#allocation4], 1
    %13 = vsyncpa %s12, 0
    loop: start=0, step=1, limit=10
    $region2: #{layer_norm_channels_last.1} parent=1 // loop_pre_header
      _
    $region3: #{layer_norm_channels_last.1} parent=1 // loop_header
      %s15 = sphi 0, %s19
      %p16 = scmp.ge.s32.totalorder %s15, 10
      %s25 = sphi 0, %s27
      %s28 = sphi 0, %s25
      %s29 = sphi 0, %s28
      %s45 = sphi 0, %s29
      %s49 = sphi 0, %s49
      %s51 = sphi 0, %s49
      %s52 = sphi 0, %s51
      %s66 = sphi 0, %s52
      %s70 = sphi 0, %s70
      %s72 = sphi 0, %s70
      %s73 = sphi 0, %s72
      %s87 = sphi 0, %s73
      %s93 = sphi 0, %s95
      %s96 = sphi 0, %s93
      %s97 = sphi 0, %s96
      %s113 = sphi 0, %s97
    $region4: #{layer_norm_channels_last.1} parent=1 // loop_header_branch
      %18 = sbr.rel (%p16) target = $region8
    $region5: #{layer_norm_channels_last.1} parent=1 // loop_body
      %s20 = ssub.s32 %s15, 1
      %s21 = ssub.s32 %s15, 2
      %s22 = sadd.s32 %s15, 1
      %s23 = ssub.s32 %s15, %s22
      %p24 = scmp.eq.s32.totalorder %s23, 0
      %s26 = sadd.s32 %s25, 1
      %s27 = scalar_select %p24, %s25, %s26
      %p30 = pneg %p24
      %p31 = scmp.eq.s32.totalorder %s15, 7
      %p32 = por %p30, %p31
      %p33 = scmp.ne.s32.totalorder %s25, %s28
      %p34 = scmp.eq.s32.totalorder %s15, 0
      %p35 = por %p33, %p34
      %p36 = scmp.ne.s32.totalorder %s25, %s28
      %p37 = scmp.eq.s32.totalorder %s20, 7
      %p38 = por %p36, %p37
      %p39 = scmp.ne.s32.totalorder %s28, %s29
      %p40 = scmp.eq.s32.totalorder %s20, 0
      %p41 = por %p39, %p40
      %p42 = scmp.ne.s32.totalorder %s28, %s29
      %p43 = scmp.eq.s32.totalorder %s21, 7
      %p44 = por %p42, %p43
      %p46 = scmp.ne.s32.totalorder %s29, %s45
      %p47 = scmp.eq.s32.totalorder %s21, 0
      %p48 = por %p46, %p47
      %s50 = sadd.s32 %s49, 1
      %p53 = scmp.eq.s32.totalorder %s15, 7
      %p54 = scmp.ne.s32.totalorder %s49, %s51
      %p55 = scmp.eq.s32.totalorder %s15, 0
      %p56 = por %p54, %p55
      %p57 = scmp.ne.s32.totalorder %s49, %s51
      %p58 = scmp.eq.s32.totalorder %s20, 7
      %p59 = por %p57, %p58
      %p60 = scmp.ne.s32.totalorder %s51, %s52
      %p61 = scmp.eq.s32.totalorder %s20, 0
      %p62 = por %p60, %p61
      %p63 = scmp.ne.s32.totalorder %s51, %s52
      %p64 = scmp.eq.s32.totalorder %s21, 7
      %p65 = por %p63, %p64
      %p67 = scmp.ne.s32.totalorder %s52, %s66
      %p68 = scmp.eq.s32.totalorder %s21, 0
      %p69 = por %p67, %p68
      %s71 = sadd.s32 %s70, 1
      %p74 = scmp.eq.s32.totalorder %s15, 7
      %p75 = scmp.ne.s32.totalorder %s70, %s72
      %p76 = scmp.eq.s32.totalorder %s15, 0
      %p77 = por %p75, %p76
      %p78 = scmp.ne.s32.totalorder %s70, %s72
      %p79 = scmp.eq.s32.totalorder %s20, 7
      %p80 = por %p78, %p79
      %p81 = scmp.ne.s32.totalorder %s72, %s73
      %p82 = scmp.eq.s32.totalorder %s20, 0
      %p83 = por %p81, %p82
      %p84 = scmp.ne.s32.totalorder %s72, %s73
      %p85 = scmp.eq.s32.totalorder %s21, 7
      %p86 = por %p84, %p85
      %p88 = scmp.ne.s32.totalorder %s73, %s87
      %p89 = scmp.eq.s32.totalorder %s21, 0
      %p90 = por %p88, %p89
      %s91 = ssub.s32 %s15, %s22
      %p92 = scmp.eq.s32.totalorder %s91, 0
      %s94 = sadd.s32 %s93, 1
      %s95 = scalar_select %p92, %s93, %s94
      %p98 = pneg %p92
      %p99 = scmp.eq.s32.totalorder %s15, 7
      %p100 = por %p98, %p99
      %p101 = scmp.ne.s32.totalorder %s93, %s96
      %p102 = scmp.eq.s32.totalorder %s15, 0
      %p103 = por %p101, %p102
      %p104 = scmp.ne.s32.totalorder %s93, %s96
      %p105 = scmp.eq.s32.totalorder %s20, 7
      %p106 = por %p104, %p105
      %p107 = scmp.ne.s32.totalorder %s96, %s97
      %p108 = scmp.eq.s32.totalorder %s20, 0
      %p109 = por %p107, %p108
      %p110 = scmp.ne.s32.totalorder %s96, %s97
      %p111 = scmp.eq.s32.totalorder %s21, 7
      %p112 = por %p110, %p111
      %p114 = scmp.ne.s32.totalorder %s97, %s113
      %p115 = scmp.eq.s32.totalorder %s21, 0
      %p116 = por %p114, %p115
      %p117 = scmp.le.s32.totalorder 1, %s15
      %p118 = scmp.lt.s32.totalorder %s15, 9
      %p119 = pnand %p117, %p118
      %p120 = pneg %p119
      // Predicated region
      $region9: #{layer_norm_channels_last.1} parent=5 // pred_check
        _
      $region10: #{layer_norm_channels_last.1} parent=5 // pred_check_branch
        %122 = sbr.rel (%p119) target = $region12
      $region11: #{layer_norm_channels_last.1} parent=5 // pred_region
        %s123 = ssub.s32 %s15, 1
        // Predicated region
        $region13: #{layer_norm_channels_last.1} parent=11 // pred_check
          %p124 = pneg %p62
        $region14: #{layer_norm_channels_last.1} parent=11 // pred_check_branch
          %126 = sbr.rel (%p124) target = $region16
        $region15: #{layer_norm_channels_last.1} parent=11 // pred_region
          _
        $region16: #{layer_norm_channels_last.1} parent=11 // pred_fallthru
          _
        // Predicated region
        $region17: #{layer_norm_channels_last.1} parent=11 // pred_check
          %p127 = pneg %p83
        $region18: #{layer_norm_channels_last.1} parent=11 // pred_check_branch
          %129 = sbr.rel (%p127) target = $region20
        $region19: #{layer_norm_channels_last.1} parent=11 // pred_region
          _
        $region20: #{layer_norm_channels_last.1} parent=11 // pred_fallthru
          _
      $region12: #{layer_norm_channels_last.1} parent=5 // pred_fallthru
        _
      %p130 = scmp.lt.s32.totalorder %s15, 8
      // Predicated region
      $region21: #{layer_norm_channels_last.1} parent=5 // pred_check
        %p131 = pneg %p130
      $region22: #{layer_norm_channels_last.1} parent=5 // pred_check_branch
        %133 = sbr.rel (%p131) target = $region24
      $region23: #{layer_norm_channels_last.1} parent=5 // pred_region
        // Predicated region
        $region25: #{layer_norm_channels_last.1} parent=23 // pred_check
          %p134 = pneg %p35
        $region26: #{layer_norm_channels_last.1} parent=23 // pred_check_branch
          %136 = sbr.rel (%p134) target = $region28
        $region27: #{layer_norm_channels_last.1} parent=23 // pred_region
          %s137 = sand.u32 %s25, 1
          %s138 = scalar_lea.sflag [#allocation3], %s137
          %s139 = sand.u32 %s25, 1
          %s140 = smul.addr %s139, 64
          %s141 = scalar_lea.vmem [#allocation2], %s140
          %s142 = smul.u32 8, %s15
          %s144 = ssub.s32 1024, 1024
          %145 = vsyncadd %s138, %s144
          %s146 = smul.addr %s142, 128
          %s147 = scalar_lea.hbm %s0, %s146
          %s148 = sshll.u32 %s141, 4
          %s149 = int_to_ptr.vmem [resolvable:$true] %s148
          %154 = dma.hbm_to_vmem [thread:$0]  %s147, 1024, %s149, %s138, 128, 128, 8
        $region28: #{layer_norm_channels_last.1} parent=23 // pred_fallthru
          _
      $region24: #{layer_norm_channels_last.1} parent=5 // pred_fallthru
        _
      %p155 = scmp.le.s32.totalorder 1, %s15
      %p156 = scmp.lt.s32.totalorder %s15, 9
      %p157 = pnand %p155, %p156
      %p158 = pneg %p157
      // Predicated region
      $region29: #{layer_norm_channels_last.1} parent=5 // pred_check
        _
      $region30: #{layer_norm_channels_last.1} parent=5 // pred_check_branch
        %160 = sbr.rel (%p157) target = $region32
      $region31: #{layer_norm_channels_last.1} parent=5 // pred_region
        %s161 = ssub.s32 %s15, 1
        %s162 = sand.u32 %s28, 1
        %s163 = scalar_lea.sflag [#allocation3], %s162
        %s164 = sand.u32 %s28, 1
        %s165 = smul.addr %s164, 64
        %s166 = scalar_lea.vmem [#allocation2], %s165
        // Predicated region
        $region33: #{layer_norm_channels_last.1} parent=31 // pred_check
          %p167 = pneg %p41
        $region34: #{layer_norm_channels_last.1} parent=31 // pred_check_branch
          %169 = sbr.rel (%p167) target = $region36
        $region35: #{layer_norm_channels_last.1} parent=31 // pred_region
          %170 = dma.done %s163, 1024
        $region36: #{layer_norm_channels_last.1} parent=31 // pred_fallthru
          _
        %s171 = sand.u32 %s28, 1
        %s172 = scalar_lea.sflag [#allocation3], %s171
        %s173 = sand.u32 %s28, 1
        %s174 = smul.addr %s173, 64
        %s175 = scalar_lea.vmem [#allocation2], %s174
        %p176 = pneg %p41
        %p177 = pneg %p38
        %p178 = pneg %p62
        %p179 = pneg %p59
        %p180 = pneg %p83
        %p181 = pneg %p80
        %p182 = pneg %p109
        %p183 = pneg %p106
        %s184 = sand.u32 %s96, 1
        %s185 = scalar_lea.sflag [#allocation4], %s184
        %s186 = sand.u32 %s96, 1
        %s187 = smul.addr %s186, 64
        %s188 = scalar_lea.vmem [#allocation5], %s187
        %s189 = smul.u32 8, %s20
        %s190 = smul.u32 8, %s20
        %v191 = vld [vmem:[%s166] sm:$0xff]
        %v192 = vld [vmem:[%s166 + $0x8] sm:$0xff]
        %v193 = vld [vmem:[%s166 + $0x10] sm:$0xff]
        %v194 = vld [vmem:[%s166 + $0x18] sm:$0xff]
        %v195 = vld [vmem:[%s166 + $0x20] sm:$0xff]
        %v196 = vld [vmem:[%s166 + $0x28] sm:$0xff]
        %v197 = vld [vmem:[%s166 + $0x30] sm:$0xff]
        %v198 = vld [vmem:[%s166 + $0x38] sm:$0xff]
        %199 = vadd.xlane.f32.xlu0 %v191
        %v200 = vpop.xlane.xlu0 %199
        %201 = vadd.xlane.f32.xlu0 %v192
        %v202 = vpop.xlane.xlu0 %201
        %203 = vadd.xlane.f32.xlu0 %v193
        %v204 = vpop.xlane.xlu0 %203
        %205 = vadd.xlane.f32.xlu0 %v194
        %v206 = vpop.xlane.xlu0 %205
        %207 = vadd.xlane.f32.xlu0 %v195
        %v208 = vpop.xlane.xlu0 %207
        %209 = vadd.xlane.f32.xlu0 %v196
        %v210 = vpop.xlane.xlu0 %209
        %211 = vadd.xlane.f32.xlu0 %v197
        %v212 = vpop.xlane.xlu0 %211
        %213 = vadd.xlane.f32.xlu0 %v198
        %v214 = vpop.xlane.xlu0 %213
        %v215 = vmul.f32 %v191, %v191
        %v216 = vmul.f32 %v192, %v192
        %v217 = vmul.f32 %v193, %v193
        %v218 = vmul.f32 %v194, %v194
        %v219 = vmul.f32 %v195, %v195
        %v220 = vmul.f32 %v196, %v196
        %v221 = vmul.f32 %v197, %v197
        %v222 = vmul.f32 %v198, %v198
        %223 = vadd.xlane.f32.xlu0 %v215
        %v224 = vpop.xlane.xlu0 %223
        %225 = vadd.xlane.f32.xlu0 %v216
        %v226 = vpop.xlane.xlu0 %225
        %227 = vadd.xlane.f32.xlu0 %v217
        %v228 = vpop.xlane.xlu0 %227
        %229 = vadd.xlane.f32.xlu0 %v218
        %v230 = vpop.xlane.xlu0 %229
        %231 = vadd.xlane.f32.xlu0 %v219
        %v232 = vpop.xlane.xlu0 %231
        %233 = vadd.xlane.f32.xlu0 %v220
        %v234 = vpop.xlane.xlu0 %233
        %235 = vadd.xlane.f32.xlu0 %v221
        %v236 = vpop.xlane.xlu0 %235
        %237 = vadd.xlane.f32.xlu0 %v222
        %v238 = vpop.xlane.xlu0 %237
        %v239 = vmul.f32 %v200, 0.0078125
        %v240 = vmul.f32 %v202, 0.0078125
        %v241 = vmul.f32 %v204, 0.0078125
        %v242 = vmul.f32 %v206, 0.0078125
        %v243 = vmul.f32 %v208, 0.0078125
        %v244 = vmul.f32 %v210, 0.0078125
        %v245 = vmul.f32 %v212, 0.0078125
        %v246 = vmul.f32 %v214, 0.0078125
        %v247 = vmul.f32 %v224, 0.0078125
        %v248 = vmul.f32 %v226, 0.0078125
        %v249 = vmul.f32 %v228, 0.0078125
        %v250 = vmul.f32 %v230, 0.0078125
        %v251 = vmul.f32 %v232, 0.0078125
        %v252 = vmul.f32 %v234, 0.0078125
        %v253 = vmul.f32 %v236, 0.0078125
        %v254 = vmul.f32 %v238, 0.0078125
        %v255 = vmul.f32 %v239, %v239
        %v256 = vmul.f32 %v240, %v240
        %v257 = vmul.f32 %v241, %v241
        %v258 = vmul.f32 %v242, %v242
        %v259 = vmul.f32 %v243, %v243
        %v260 = vmul.f32 %v244, %v244
        %v261 = vmul.f32 %v245, %v245
        %v262 = vmul.f32 %v246, %v246
        %v263 = vsub.f32 %v247, %v255
        %v264 = vsub.f32 %v248, %v256
        %v265 = vsub.f32 %v249, %v257
        %v266 = vsub.f32 %v250, %v258
        %v267 = vsub.f32 %v251, %v259
        %v268 = vsub.f32 %v252, %v260
        %v269 = vsub.f32 %v253, %v261
        %v270 = vsub.f32 %v254, %v262
        %v271 = vmax.f32 %v263, 0.0
        %v272 = vmax.f32 %v264, 0.0
        %v273 = vmax.f32 %v265, 0.0
        %v274 = vmax.f32 %v266, 0.0
        %v275 = vmax.f32 %v267, 0.0
        %v276 = vmax.f32 %v268, 0.0
        %v277 = vmax.f32 %v269, 0.0
        %v278 = vmax.f32 %v270, 0.0
        %v279 = vadd.f32 %v271, 1e-06
        %v280 = vadd.f32 %v272, 1e-06
        %v281 = vadd.f32 %v273, 1e-06
        %v282 = vadd.f32 %v274, 1e-06
        %v283 = vadd.f32 %v275, 1e-06
        %v284 = vadd.f32 %v276, 1e-06
        %v285 = vadd.f32 %v277, 1e-06
        %v286 = vadd.f32 %v278, 1e-06
        %v287 = vrsqrt.pop %v279
        %v288 = vrsqrt.pop %v280
        %v289 = vrsqrt.pop %v281
        %v290 = vrsqrt.pop %v282
        %v291 = vrsqrt.pop %v283
        %v292 = vrsqrt.pop %v284
        %v293 = vrsqrt.pop %v285
        %v294 = vrsqrt.pop %v286
        %v295 = vld [vmem:[%s1] sm:$0x1]
        %v296 = vld [vmem:[%s2] sm:$0x1]
        %v297 = vsub.f32 %v191, %v239
        %v298 = vsub.f32 %v192, %v240
        %v299 = vsub.f32 %v193, %v241
        %v300 = vsub.f32 %v194, %v242
        %v301 = vsub.f32 %v195, %v243
        %v302 = vsub.f32 %v196, %v244
        %v303 = vsub.f32 %v197, %v245
        %v304 = vsub.f32 %v198, %v246
        %v305 = vmul.f32 %v297, %v287
        %v306 = vmul.f32 %v298, %v288
        %v307 = vmul.f32 %v299, %v289
        %v308 = vmul.f32 %v300, %v290
        %v309 = vmul.f32 %v301, %v291
        %v310 = vmul.f32 %v302, %v292
        %v311 = vmul.f32 %v303, %v293
        %v312 = vmul.f32 %v304, %v294
        %v314 = vlaneseq
        %v315 = vshrl.u32 %v314, 7
        %v316 = vsub.s32 0, %v315
        %v317 = vrot.slane %v295, %v316
        %v319 = vmul.f32 %v305, %v317
        %v320 = vmul.f32 %v306, %v317
        %v321 = vmul.f32 %v307, %v317
        %v322 = vmul.f32 %v308, %v317
        %v323 = vmul.f32 %v309, %v317
        %v324 = vmul.f32 %v310, %v317
        %v325 = vmul.f32 %v311, %v317
        %v326 = vmul.f32 %v312, %v317
        %v328 = vlaneseq
        %v329 = vshrl.u32 %v328, 7
        %v330 = vsub.s32 0, %v329
        %v331 = vrot.slane %v296, %v330
        %v333 = vadd.f32 %v319, %v331
        %v334 = vadd.f32 %v320, %v331
        %v335 = vadd.f32 %v321, %v331
        %v336 = vadd.f32 %v322, %v331
        %v337 = vadd.f32 %v323, %v331
        %v338 = vadd.f32 %v324, %v331
        %v339 = vadd.f32 %v325, %v331
        %v340 = vadd.f32 %v326, %v331
        %341 = vst [vmem:[%s188] sm:$0xff] %v333
        %342 = vst [vmem:[%s188 + $0x8] sm:$0xff] %v334
        %343 = vst [vmem:[%s188 + $0x10] sm:$0xff] %v335
        %344 = vst [vmem:[%s188 + $0x18] sm:$0xff] %v336
        %345 = vst [vmem:[%s188 + $0x20] sm:$0xff] %v337
        %346 = vst [vmem:[%s188 + $0x28] sm:$0xff] %v338
        %347 = vst [vmem:[%s188 + $0x30] sm:$0xff] %v339
        %348 = vst [vmem:[%s188 + $0x38] sm:$0xff] %v340
        %s349 = sand.u32 %s96, 1
        %s350 = scalar_lea.sflag [#allocation4], %s349
        %s351 = sand.u32 %s96, 1
        %s352 = smul.addr %s351, 64
        %s353 = scalar_lea.vmem [#allocation5], %s352
        // Predicated region
        $region37: #{layer_norm_channels_last.1} parent=31 // pred_check
          %p354 = pneg %p106
        $region38: #{layer_norm_channels_last.1} parent=31 // pred_check_branch
          %356 = sbr.rel (%p354) target = $region40
        $region39: #{layer_norm_channels_last.1} parent=31 // pred_region
          %s357 = smul.u32 8, %s20
          %s359 = ssub.s32 1024, 1024
          %360 = vsyncadd %s350, %s359
          %s361 = smul.addr %s357, 128
          %s362 = scalar_lea.hbm %s3, %s361
          %s363 = sshll.u32 %s353, 4
          %s364 = int_to_ptr.vmem [resolvable:$true] %s363
          %369 = dma.vmem_to_hbm [thread:$0]  %s364, 1024, %s362, %s350, 128, 128, 8
        $region40: #{layer_norm_channels_last.1} parent=31 // pred_fallthru
          _
      $region32: #{layer_norm_channels_last.1} parent=5 // pred_fallthru
        _
      %p370 = scmp.le.s32.totalorder 2, %s15
      // Predicated region
      $region41: #{layer_norm_channels_last.1} parent=5 // pred_check
        %p371 = pneg %p370
      $region42: #{layer_norm_channels_last.1} parent=5 // pred_check_branch
        %373 = sbr.rel (%p371) target = $region44
      $region43: #{layer_norm_channels_last.1} parent=5 // pred_region
        %s374 = ssub.s32 %s15, 2
        // Predicated region
        $region45: #{layer_norm_channels_last.1} parent=43 // pred_check
          %p375 = pneg %p112
        $region46: #{layer_norm_channels_last.1} parent=43 // pred_check_branch
          %377 = sbr.rel (%p375) target = $region48
        $region47: #{layer_norm_channels_last.1} parent=43 // pred_region
          %s378 = sand.u32 %s97, 1
          %s379 = scalar_lea.sflag [#allocation4], %s378
          %s380 = sand.u32 %s97, 1
          %s381 = smul.addr %s380, 64
          %s382 = scalar_lea.vmem [#allocation5], %s381
          %383 = dma.done %s379, 1024
        $region48: #{layer_norm_channels_last.1} parent=43 // pred_fallthru
          _
      $region44: #{layer_norm_channels_last.1} parent=5 // pred_fallthru
        _
    $region6: #{layer_norm_channels_last.1} parent=1 // loop_footer
      %s19 = sadd.s32 1, %s15
    $region7: #{layer_norm_channels_last.1} parent=1 // loop_footer_branch
      %14 = sbr.rel target = $region3
    $region8: #{layer_norm_channels_last.1} parent=1 // loop_exit
      _
    %384 = vsyncpa [#allocation3], 1
    %s385 = scalar_lea.sflag [#allocation3], 1
    %386 = vsyncpa %s385, 1
    %387 = vsyncpa [#allocation4], 1
    %s388 = scalar_lea.sflag [#allocation4], 1
    %389 = vsyncpa %s388, 1

</llo_original>
